<compile_context>
chip_gen: v7x
topology: tpu7x:2x2x1
jax: 0.10.0
libtpu: 0.0.40
codegen_flags: <defaults>
</compile_context>

<pallas_src>
import jax
import jax.numpy as jnp
from jax.experimental import pallas as pl
from jax.experimental.pallas import tpu as pltpu


def _conv_bn_relu_kernel(p_ref, w_ref, b_ref, o_ref):
    # p_ref: (TM, 9*Cin)    bf16 im2col patches for TM output pixels
    # w_ref: (9*Cin, Cp)    bf16 conv weights with BN scale folded in
    # b_ref: (1, Cp)        f32 folded BN bias
    # o_ref: (TM, Cp)       f32 output tile (lane-dense: Cp % 128 == 0)
    acc = jnp.dot(p_ref[...], w_ref[...], preferred_element_type=jnp.float32)
    o_ref[...] = jnp.maximum(acc + b_ref[...], 0.0).astype(o_ref.dtype)


def conv2d_bn_relu(x_nchw, weight_oihw, gamma, beta, running_mean, running_var,
                   eps=1e-5, row_tile=128):
    """Forward pass of Conv2dBnRelu (inference mode)."""
    # TODO(synk): training-mode Dropout2d (random channel zeroing) not modeled;
    # inference semantics (identity) are used.
    N, Cin, H, W = x_nchw.shape
    Cout, Cin_w, KH, KW = weight_oihw.shape
    assert (KH, KW) == (3, 3) and Cin_w == Cin

    # ---- fold BatchNorm (eval) into the conv weight / a per-channel bias ----
    scale = gamma / jnp.sqrt(running_var + eps)                   # (Cout,)
    bias = beta - running_mean * scale                            # (Cout,)
    # (Cout, Cin, KH, KW) -> (KH, KW, Cin, Cout) -> (9*Cin, Cout), scale folded
    w = jnp.transpose(weight_oihw.astype(jnp.float32), (2, 3, 1, 0))
    w = w.reshape(KH * KW * Cin, Cout) * scale[None, :]

    # ---- im2col in plain JAX: (N*H*W, 9*Cin), tap order (ky, kx, cin) ----
    x_nhwc = jnp.transpose(x_nchw, (0, 2, 3, 1)).astype(jnp.float32)
    x_pad = jnp.pad(x_nhwc, ((0, 0), (1, 1), (1, 1), (0, 0)))
    taps = [x_pad[:, ky:ky + H, kx:kx + W, :]
            for ky in range(KH) for kx in range(KW)]
    patches = jnp.concatenate(taps, axis=-1).reshape(N * H * W, KH * KW * Cin)

    # ---- pad to TPU-friendly shapes ----
    rows = N * H * W
    rows_pad = pl.cdiv(rows, row_tile) * row_tile
    cout_pad = pl.cdiv(Cout, 128) * 128      # lane-dense output stores
    K = KH * KW * Cin

    patches = jnp.pad(patches, ((0, rows_pad - rows), (0, 0)))
    patches = patches.astype(jnp.bfloat16)                        # bf16 MXU operand
    w = jnp.pad(w, ((0, 0), (0, cout_pad - Cout))).astype(jnp.bfloat16)
    bias = jnp.pad(bias.astype(jnp.float32),
                   (0, cout_pad - Cout)).reshape(1, cout_pad)

    # ---- Pallas call: grid over row tiles of the flattened pixel axis ----
    out = pl.pallas_call(
        _conv_bn_relu_kernel,
        out_shape=jax.ShapeDtypeStruct((rows_pad, cout_pad), jnp.float32),
        grid_spec=pltpu.PrefetchScalarGridSpec(
            num_scalar_prefetch=0,
            grid=(rows_pad // row_tile,),
            in_specs=[
                pl.BlockSpec((row_tile, K), lambda i: (i, 0)),
                pl.BlockSpec((K, cout_pad), lambda i: (0, 0)),
                pl.BlockSpec((1, cout_pad), lambda i: (0, 0)),
            ],
            out_specs=pl.BlockSpec((row_tile, cout_pad), lambda i: (i, 0)),
        ),
        compiler_params=pltpu.CompilerParams(
            dimension_semantics=("parallel",)),
    )(patches, w, bias)

    # slice off channel/row padding, back to PyTorch NCHW convention
    out = out[:rows, :Cout].reshape(N, H, W, Cout)
    return jnp.transpose(out, (0, 3, 1, 2))


def _reference(x_nchw, weight_oihw, gamma, beta, running_mean, running_var,
               eps=1e-5):
    """Pure-JAX reference (lax conv) for correctness checking."""
    y = jax.lax.conv_general_dilated(
        x_nchw.astype(jnp.float32), weight_oihw.astype(jnp.float32),
        window_strides=(1, 1), padding="SAME",
        dimension_numbers=("NCHW", "OIHW", "NCHW"))
    scale = gamma / jnp.sqrt(running_var + eps)
    bias = beta - running_mean * scale
    y = y * scale[None, :, None, None] + bias[None, :, None, None]
    return jnp.maximum(y, 0.0)


if __name__ == "__main__":
    key = jax.random.PRNGKey(0)
    k_x, k_w, k_g, k_b = jax.random.split(key, 4)

    N, Cin, H, W = 2, 4, 16, 16
    Cout = 8

    x = jax.random.normal(k_x, (N, Cin, H, W), dtype=jnp.float32)
    # Deterministic synthetic parameters (shapes per nn.Conv2d / nn.BatchNorm2d)
    weight = jax.random.normal(k_w, (Cout, Cin, 3, 3), dtype=jnp.float32) * 0.1
    gamma = 1.0 + 0.1 * jax.random.normal(k_g, (Cout,), dtype=jnp.float32)
    beta = 0.1 * jax.random.normal(k_b, (Cout,), dtype=jnp.float32)
    running_mean = jnp.zeros((Cout,), dtype=jnp.float32)
    running_var = jnp.ones((Cout,), dtype=jnp.float32)

    out = conv2d_bn_relu(x, weight, gamma, beta, running_mean, running_var)
    out = jax.block_until_ready(out)

    ref = _reference(x, weight, gamma, beta, running_mean, running_var)
    assert out.shape == (N, Cout, H, W)
    # bf16 MXU operands with f32 accumulation -> loosened tolerance vs f32 ref
    assert jnp.max(jnp.abs(out - ref)) < 5e-2, "mismatch vs reference"

    print("KERNEL_OK")
</pallas_src>

<mosaic_0001>
module attributes {stable_mosaic.version = 11 : i64} {
  func.func @_conv_bn_relu_kernel(%arg0: i32, %arg1: memref<128x36xbf16, #tpu.memory_space<vmem>>, %arg2: memref<36x128xbf16, #tpu.memory_space<vmem>>, %arg3: memref<1x128xf32, #tpu.memory_space<vmem>>, %arg4: memref<128x128xf32, #tpu.memory_space<vmem>>) attributes {dimension_semantics = [#tpu.dimension_semantics<parallel>], iteration_bounds = array<i64: 4>, scalar_prefetch = 0 : i64, scratch_operands = 0 : i64, tpu.core_type = #tpu.core_type<tc>, window_params = [{transform_indices = @transform_0, window_bounds = array<i64: 128, 36>}, {pipeline_mode = #tpu.pipeline_mode<synchronous>, transform_indices = @transform_1, window_bounds = array<i64: 36, 128>}, {pipeline_mode = #tpu.pipeline_mode<synchronous>, transform_indices = @transform_2, window_bounds = array<i64: 1, 128>}, {transform_indices = @transform_3, window_bounds = array<i64: 128, 128>}]} {
    %c0 = arith.constant 0 : index
    %c0_0 = arith.constant 0 : index
    %0 = vector.load %arg1[%c0, %c0_0] : memref<128x36xbf16, #tpu.memory_space<vmem>>, vector<128x36xbf16>
    %c0_1 = arith.constant 0 : index
    %c0_2 = arith.constant 0 : index
    %1 = vector.load %arg2[%c0_1, %c0_2] : memref<36x128xbf16, #tpu.memory_space<vmem>>, vector<36x128xbf16>
    %cst = arith.constant dense<0.000000e+00> : vector<128x128xf32>
    %2 = tpu.matmul %0, %1, %cst {dimension_numbers = #tpu.dot_dimension_numbers<[1], [0], [0], [1], [0, 0, 1, 1], [], []>} : vector<128x36xbf16>, vector<36x128xbf16>, vector<128x128xf32> -> vector<128x128xf32>
    %c0_3 = arith.constant 0 : index
    %c0_4 = arith.constant 0 : index
    %3 = vector.load %arg3[%c0_3, %c0_4] : memref<1x128xf32, #tpu.memory_space<vmem>>, vector<1x128xf32>
    %4 = vector.broadcast %3 : vector<1x128xf32> to vector<128x128xf32>
    %5 = arith.addf %2, %4 : vector<128x128xf32>
    %cst_5 = arith.constant 0.000000e+00 : f32
    %6 = vector.broadcast %cst_5 : f32 to vector<128x128xf32>
    %7 = arith.maximumf %5, %6 : vector<128x128xf32>
    %c0_6 = arith.constant 0 : index
    %c0_7 = arith.constant 0 : index
    %8 = vector.load %arg4[%c0_6, %c0_7] : memref<128x128xf32, #tpu.memory_space<vmem>>, vector<128x128xf32>
    tpu.vector_store %arg4[%c0_6, %c0_7], %7 {strides = array<i32>} : memref<128x128xf32, #tpu.memory_space<vmem>>, vector<128x128xf32>,
    return
  }
  func.func @transform_0(%arg0: i32) -> (i32, i32) {
    %c0_i32 = arith.constant 0 : i32
    %c0_i32_0 = arith.constant 0 : i32
    return %arg0, %c0_i32 : i32, i32
  }
  func.func @transform_1(%arg0: i32) -> (i32, i32) {
    %c0_i32 = arith.constant 0 : i32
    %c0_i32_0 = arith.constant 0 : i32
    %c0_i32_1 = arith.constant 0 : i32
    return %c0_i32, %c0_i32_0 : i32, i32
  }
  func.func @transform_2(%arg0: i32) -> (i32, i32) {
    %c0_i32 = arith.constant 0 : i32
    %c0_i32_0 = arith.constant 0 : i32
    %c0_i32_1 = arith.constant 0 : i32
    return %c0_i32, %c0_i32_0 : i32, i32
  }
  func.func @transform_3(%arg0: i32) -> (i32, i32) {
    %c0_i32 = arith.constant 0 : i32
    %c0_i32_0 = arith.constant 0 : i32
    return %arg0, %c0_i32 : i32, i32
  }
}

</mosaic_0001>

<llo_original>
// kernel: tpu_custom_call.1
$region0: #{tpu_custom_call.1}
  #allocation0 [shape = 'u32[]', space=smem, size = 0x4, offset = 0x4, fixed_abs, tag = 'smem constant byte address 0x4 - core index']
  #allocation1 [shape = 'u32[144,128]{1,0:T(1,128)}', space=vmem, size = 0x12000, scoped, tag = 'internal scratch']
  %s0 = inlined_call_operand.vmem [shape: bf16[512,36], index: 0, kind: input, shape index: {}]
  %s1 = inlined_call_operand.vmem [shape: bf16[36,128], index: 1, kind: input, shape index: {}]
  %s2 = inlined_call_operand.vmem [shape: f32[1,128], index: 2, kind: input, shape index: {}]
  %s3 = inlined_call_operand.hbm [shape: f32[512,128], index: 3, kind: output, shape index: {}]
  %s4 = sld [smem:[#allocation0]]
  $region45: #{tpu_custom_call.1} parent=0
    _
  %s6 = ssub.s32 1, %s4
  %s7 = scalar_select 0, %s6, %s4
  $region1: #{tpu_custom_call.1} parent=0
    #allocation2 [shape = 'u8[131072]{0}', space=vmem, size = 0x20000, scoped, tag = 'output window, operand 0']
    #allocation3 [shape = 's32[2]{0}', space=sflag, size = 0x8, scoped, tag = 'scoped memory for tpu_custom_call.1']
    %8 = vsyncpa [#allocation3], 0
    %s9 = scalar_lea.sflag [#allocation3], 1
    %10 = vsyncpa %s9, 0
    loop: start=0, step=1, limit=6
    $region2: #{tpu_custom_call.1} parent=1 // loop_pre_header
      _
    $region3: #{tpu_custom_call.1} parent=1 // loop_header
      %s12 = sphi 0, %s16
      %p13 = scmp.ge.s32.totalorder %s12, 6
      %s22 = sphi 0, %s24
      %s25 = sphi 0, %s22
      %s26 = sphi 0, %s25
      %s42 = sphi 0, %s26
      %s46 = sphi 0, %s46
      %s48 = sphi 0, %s46
      %s49 = sphi 0, %s48
      %s63 = sphi 0, %s49
      %s67 = sphi 0, %s67
      %s69 = sphi 0, %s67
      %s70 = sphi 0, %s69
      %s84 = sphi 0, %s70
      %s90 = sphi 0, %s92
      %s93 = sphi 0, %s90
      %s94 = sphi 0, %s93
      %s110 = sphi 0, %s94
    $region4: #{tpu_custom_call.1} parent=1 // loop_header_branch
      %15 = sbr.rel (%p13) target = $region8
    $region5: #{tpu_custom_call.1} parent=1 // loop_body
      %s17 = ssub.s32 %s12, 1
      %s18 = ssub.s32 %s12, 2
      %s19 = sadd.s32 %s12, 1
      %s20 = ssub.s32 %s12, %s19
      %p21 = scmp.eq.s32.totalorder %s20, 0
      %s23 = sadd.s32 %s22, 1
      %s24 = scalar_select %p21, %s22, %s23
      %p27 = pneg %p21
      %p28 = scmp.eq.s32.totalorder %s12, 3
      %p29 = por %p27, %p28
      %p30 = scmp.ne.s32.totalorder %s22, %s25
      %p31 = scmp.eq.s32.totalorder %s12, 0
      %p32 = por %p30, %p31
      %p33 = scmp.ne.s32.totalorder %s22, %s25
      %p34 = scmp.eq.s32.totalorder %s17, 3
      %p35 = por %p33, %p34
      %p36 = scmp.ne.s32.totalorder %s25, %s26
      %p37 = scmp.eq.s32.totalorder %s17, 0
      %p38 = por %p36, %p37
      %p39 = scmp.ne.s32.totalorder %s25, %s26
      %p40 = scmp.eq.s32.totalorder %s18, 3
      %p41 = por %p39, %p40
      %p43 = scmp.ne.s32.totalorder %s26, %s42
      %p44 = scmp.eq.s32.totalorder %s18, 0
      %p45 = por %p43, %p44
      %s47 = sadd.s32 %s46, 1
      %p50 = scmp.eq.s32.totalorder %s12, 3
      %p51 = scmp.ne.s32.totalorder %s46, %s48
      %p52 = scmp.eq.s32.totalorder %s12, 0
      %p53 = por %p51, %p52
      %p54 = scmp.ne.s32.totalorder %s46, %s48
      %p55 = scmp.eq.s32.totalorder %s17, 3
      %p56 = por %p54, %p55
      %p57 = scmp.ne.s32.totalorder %s48, %s49
      %p58 = scmp.eq.s32.totalorder %s17, 0
      %p59 = por %p57, %p58
      %p60 = scmp.ne.s32.totalorder %s48, %s49
      %p61 = scmp.eq.s32.totalorder %s18, 3
      %p62 = por %p60, %p61
      %p64 = scmp.ne.s32.totalorder %s49, %s63
      %p65 = scmp.eq.s32.totalorder %s18, 0
      %p66 = por %p64, %p65
      %s68 = sadd.s32 %s67, 1
      %p71 = scmp.eq.s32.totalorder %s12, 3
      %p72 = scmp.ne.s32.totalorder %s67, %s69
      %p73 = scmp.eq.s32.totalorder %s12, 0
      %p74 = por %p72, %p73
      %p75 = scmp.ne.s32.totalorder %s67, %s69
      %p76 = scmp.eq.s32.totalorder %s17, 3
      %p77 = por %p75, %p76
      %p78 = scmp.ne.s32.totalorder %s69, %s70
      %p79 = scmp.eq.s32.totalorder %s17, 0
      %p80 = por %p78, %p79
      %p81 = scmp.ne.s32.totalorder %s69, %s70
      %p82 = scmp.eq.s32.totalorder %s18, 3
      %p83 = por %p81, %p82
      %p85 = scmp.ne.s32.totalorder %s70, %s84
      %p86 = scmp.eq.s32.totalorder %s18, 0
      %p87 = por %p85, %p86
      %s88 = ssub.s32 %s12, %s19
      %p89 = scmp.eq.s32.totalorder %s88, 0
      %s91 = sadd.s32 %s90, 1
      %s92 = scalar_select %p89, %s90, %s91
      %p95 = pneg %p89
      %p96 = scmp.eq.s32.totalorder %s12, 3
      %p97 = por %p95, %p96
      %p98 = scmp.ne.s32.totalorder %s90, %s93
      %p99 = scmp.eq.s32.totalorder %s12, 0
      %p100 = por %p98, %p99
      %p101 = scmp.ne.s32.totalorder %s90, %s93
      %p102 = scmp.eq.s32.totalorder %s17, 3
      %p103 = por %p101, %p102
      %p104 = scmp.ne.s32.totalorder %s93, %s94
      %p105 = scmp.eq.s32.totalorder %s17, 0
      %p106 = por %p104, %p105
      %p107 = scmp.ne.s32.totalorder %s93, %s94
      %p108 = scmp.eq.s32.totalorder %s18, 3
      %p109 = por %p107, %p108
      %p111 = scmp.ne.s32.totalorder %s94, %s110
      %p112 = scmp.eq.s32.totalorder %s18, 0
      %p113 = por %p111, %p112
      %p114 = scmp.le.s32.totalorder 1, %s12
      %p115 = scmp.lt.s32.totalorder %s12, 5
      %p116 = pnand %p114, %p115
      %p117 = pneg %p116
      // Predicated region
      $region9: #{tpu_custom_call.1} parent=5 // pred_check
        _
      $region10: #{tpu_custom_call.1} parent=5 // pred_check_branch
        %119 = sbr.rel (%p116) target = $region12
      $region11: #{tpu_custom_call.1} parent=5 // pred_region
        %s120 = ssub.s32 %s12, 1
        // Predicated region
        $region13: #{tpu_custom_call.1} parent=11 // pred_check
          %p121 = pneg %p59
        $region14: #{tpu_custom_call.1} parent=11 // pred_check_branch
          %123 = sbr.rel (%p121) target = $region16
        $region15: #{tpu_custom_call.1} parent=11 // pred_region
          _
        $region16: #{tpu_custom_call.1} parent=11 // pred_fallthru
          _
        // Predicated region
        $region17: #{tpu_custom_call.1} parent=11 // pred_check
          %p124 = pneg %p80
        $region18: #{tpu_custom_call.1} parent=11 // pred_check_branch
          %126 = sbr.rel (%p124) target = $region20
        $region19: #{tpu_custom_call.1} parent=11 // pred_region
          _
        $region20: #{tpu_custom_call.1} parent=11 // pred_fallthru
          _
      $region12: #{tpu_custom_call.1} parent=5 // pred_fallthru
        _
      %p127 = scmp.lt.s32.totalorder %s12, 4
      // Predicated region
      $region21: #{tpu_custom_call.1} parent=5 // pred_check
        %p128 = pneg %p127
      $region22: #{tpu_custom_call.1} parent=5 // pred_check_branch
        %130 = sbr.rel (%p128) target = $region24
      $region23: #{tpu_custom_call.1} parent=5 // pred_region
        // Predicated region
        $region25: #{tpu_custom_call.1} parent=23 // pred_check
          %p131 = pneg %p32
        $region26: #{tpu_custom_call.1} parent=23 // pred_check_branch
          %133 = sbr.rel (%p131) target = $region28
        $region27: #{tpu_custom_call.1} parent=23 // pred_region
          %s134 = smul.u32 16, %s12
          %p135 = scmp.lt.s32.totalorder %s134, 63
          %s136 = scalar_select %p135, %s134, 63
          %s137 = smul.addr %s136, 4
          %s138 = scalar_lea.vmem %s0, %s137
          %s139 = smul.u32 16, %s12
        $region28: #{tpu_custom_call.1} parent=23 // pred_fallthru
          _
      $region24: #{tpu_custom_call.1} parent=5 // pred_fallthru
        _
      %p140 = scmp.le.s32.totalorder 1, %s12
      %p141 = scmp.lt.s32.totalorder %s12, 5
      %p142 = pnand %p140, %p141
      %p143 = pneg %p142
      // Predicated region
      $region29: #{tpu_custom_call.1} parent=5 // pred_check
        _
      $region30: #{tpu_custom_call.1} parent=5 // pred_check_branch
        %145 = sbr.rel (%p142) target = $region32
      $region31: #{tpu_custom_call.1} parent=5 // pred_region
        %s146 = ssub.s32 %s12, 1
        %s147 = smul.u32 16, %s17
        %p148 = scmp.lt.s32.totalorder %s147, 63
        %s149 = scalar_select %p148, %s147, 63
        %s150 = smul.addr %s149, 4
        %s151 = scalar_lea.vmem %s0, %s150
        %p152 = pneg %p38
        %p153 = pneg %p35
        %p154 = pneg %p59
        %p155 = pneg %p56
        %p156 = pneg %p80
        %p157 = pneg %p77
        %p158 = pneg %p106
        %p159 = pneg %p103
        %s160 = sand.u32 %s93, 1
        %s161 = scalar_lea.sflag [#allocation3], %s160
        %s162 = sand.u32 %s93, 1
        %s163 = smul.addr %s162, 128
        %s164 = scalar_lea.vmem [#allocation2], %s163
        %s165 = smul.u32 16, %s17
        %p166 = scmp.lt.s32.totalorder %s165, 63
        %s167 = scalar_select %p166, %s165, 63
        %s168 = smul.addr %s167, 4
        %s169 = scalar_lea.vmem %s0, %s168
        %s170 = smul.u32 16, %s17
        %s171 = smul.u32 16, %s17
        %v173 = vld [vmem:[%s169] sm:$0xf]
        %v174 = vld [vmem:[%s169 + $0x4] sm:$0xf]
        %v175 = vld [vmem:[%s169 + $0x8] sm:$0xf]
        %v176 = vld [vmem:[%s169 + $0xc] sm:$0xf]
        %v177 = vld [vmem:[%s169 + $0x10] sm:$0xf]
        %v178 = vld [vmem:[%s169 + $0x14] sm:$0xf]
        %v179 = vld [vmem:[%s169 + $0x18] sm:$0xf]
        %v180 = vld [vmem:[%s169 + $0x1c] sm:$0xf]
        %v181 = vld [vmem:[%s169 + $0x20] sm:$0xf]
        %v182 = vld [vmem:[%s169 + $0x24] sm:$0xf]
        %v183 = vld [vmem:[%s169 + $0x28] sm:$0xf]
        %v184 = vld [vmem:[%s169 + $0x2c] sm:$0xf]
        %v185 = vld [vmem:[%s169 + $0x30] sm:$0xf]
        %v186 = vld [vmem:[%s169 + $0x34] sm:$0xf]
        %v187 = vld [vmem:[%s169 + $0x38] sm:$0xf]
        %v188 = vld [vmem:[%s169 + $0x3c] sm:$0xf]
        %v189 = vld [vmem:[%s1] sm:$0xf]
        %v190 = vld [vmem:[%s1 + $0x4] sm:$0xf]
        %v191 = vld [vmem:[%s1 + $0x8] sm:$0xf]
        %v192 = vld [vmem:[%s1 + $0xc] sm:$0xf]
        %v193 = vld [vmem:[%s1 + $0x10] sm:$0x3]
        %v194 = vld [vmem:[%s2] sm:$0x1]
        %v196 = vlaneseq
        %v197 = vshrl.u32 %v196, 7
        %v198 = vsub.s32 0, %v197
        %v199 = vrot.slane %v194, %v198
        %v217 = vunpack.c.l.b16 %v173
        %v218 = vunpack.c.l.b16 %v174
        %v219 = vunpack.c.l.b16 %v175
        %v220 = vunpack.c.l.b16 %v176
        %v221 = vunpack.c.l.b16 %v177
        %v222 = vunpack.c.l.b16 %v178
        %v223 = vunpack.c.l.b16 %v179
        %v224 = vunpack.c.l.b16 %v180
        %v225 = vunpack.c.l.b16 %v181
        %v226 = vunpack.c.l.b16 %v182
        %v227 = vunpack.c.l.b16 %v183
        %v228 = vunpack.c.l.b16 %v184
        %v229 = vunpack.c.l.b16 %v185
        %v230 = vunpack.c.l.b16 %v186
        %v231 = vunpack.c.l.b16 %v187
        %v232 = vunpack.c.l.b16 %v188
        %v233 = vpack.c.b16 %v218, %v217
        %v234 = vpack.c.b16 %v220, %v219
        %v235 = vpack.c.b16 %v222, %v221
        %v236 = vpack.c.b16 %v224, %v223
        %v237 = vpack.c.b16 %v226, %v225
        %v238 = vpack.c.b16 %v228, %v227
        %v239 = vpack.c.b16 %v230, %v229
        %v240 = vpack.c.b16 %v232, %v231
        %v246 = vunpack.c.l.b16 %v189
        %v247 = vunpack.c.l.b16 %v190
        %v248 = vunpack.c.l.b16 %v191
        %v249 = vunpack.c.l.b16 %v192
        %v250 = vunpack.c.l.b16 %v193
        %v251 = vpack.c.b16 %v247, %v246
        %v252 = vpack.c.b16 %v249, %v248
        %v253 = vpack.c.b16 %v250, %v250
        %vm256 = vcmask 293888
        %v258 = vsel %vm256, %v233, 0
        %v261 = vsel %vm256, %v234, 0
        %v264 = vsel %vm256, %v235, 0
        %v267 = vsel %vm256, %v236, 0
        %v270 = vsel %vm256, %v237, 0
        %v273 = vsel %vm256, %v238, 0
        %v276 = vsel %vm256, %v239, 0
        %v279 = vsel %vm256, %v240, 0
        %vm281 = vcmask 1041408
        %v283 = vsel %vm281, %v253, 0
        %285 = vmatprep.subr.bf16.mxu0 0
        %286 = vmatpush1.bf16.msra.mxu0 %v251
        %287 = vmatprep.subr.bf16.mxu0 0
        %288 = vmatpush1.bf16.msra.mxu0 %v252
        %289 = vmatprep.subr.bf16.mxu0 0
        %290 = vmatpush1.bf16.msra.mxu0 %v283
        %291 = vmatprep.subr.bf16.mxu0 0
        %292 = vmatpush1.bf16.msra.mxu0 0
        %293 = vmatprep.subr.bf16.mxu0 0
        %294 = vmatpush1.bf16.msra.mxu0 0
        %295 = vmatprep.subr.bf16.mxu0 0
        %296 = vmatpush1.bf16.msra.mxu0 0
        %297 = vmatprep.subr.bf16.mxu0 0
        %298 = vmatpush1.bf16.msra.mxu0 0
        %299 = vmatprep.subr.bf16.mxu0 0
        %300 = vmatpush1.bf16.msra.mxu0 0
        %301 = vmatprep.subr.bf16.mxu0 0
        %302 = vmatpush1.bf16.msra.mxu0 0
        %303 = vmatprep.subr.bf16.mxu0 0
        %304 = vmatpush1.bf16.msra.mxu0 0
        %305 = vmatprep.subr.bf16.mxu0 0
        %306 = vmatpush1.bf16.msra.mxu0 0
        %307 = vmatprep.subr.bf16.mxu0 0
        %308 = vmatpush1.bf16.msra.mxu0 0
        %309 = vmatprep.subr.bf16.mxu0 0
        %310 = vmatpush1.bf16.msra.mxu0 0
        %311 = vmatprep.subr.bf16.mxu0 0
        %312 = vmatpush1.bf16.msra.mxu0 0
        %313 = vmatprep.subr.bf16.mxu0 0
        %314 = vmatpush1.bf16.msra.mxu0 0
        %315 = vmatprep.subr.bf16.mxu0 0
        %316 = vmatpush1.bf16.msra.mxu0 0
        %317 = vmatprep.mubr.bf16.mxu0 0
        %318 = vmatmul.mubr.bf16.gmra.mrb[0].mxu0 %v258
        %v319 = vpop.f32.mrb[0].mxu0
        %v320 = vadd.f32 %v199, %v319
        %v321 = vpop.f32.mrb[0].mxu0
        %v322 = vpop.f32.mrb[0].mxu0
        %v323 = vadd.f32 %v199, %v322
        %v324 = vpop.f32.mrb[0].mxu0
        %325 = vmatprep.mubr.bf16.mxu0 0
        %326 = vmatmul.mubr.bf16.gmra.mrb[0].mxu0 %v261
        %v327 = vpop.f32.mrb[0].mxu0
        %v328 = vadd.f32 %v199, %v327
        %v329 = vpop.f32.mrb[0].mxu0
        %v330 = vpop.f32.mrb[0].mxu0
        %v331 = vadd.f32 %v199, %v330
        %v332 = vpop.f32.mrb[0].mxu0
        %333 = vmatprep.mubr.bf16.mxu0 0
        %334 = vmatmul.mubr.bf16.gmra.mrb[0].mxu0 %v264
        %v335 = vpop.f32.mrb[0].mxu0
        %v336 = vadd.f32 %v199, %v335
        %v337 = vpop.f32.mrb[0].mxu0
        %v338 = vpop.f32.mrb[0].mxu0
        %v339 = vadd.f32 %v199, %v338
        %v340 = vpop.f32.mrb[0].mxu0
        %341 = vmatprep.mubr.bf16.mxu0 0
        %342 = vmatmul.mubr.bf16.gmra.mrb[0].mxu0 %v267
        %v343 = vpop.f32.mrb[0].mxu0
        %v344 = vadd.f32 %v199, %v343
        %v345 = vpop.f32.mrb[0].mxu0
        %v346 = vpop.f32.mrb[0].mxu0
        %v347 = vadd.f32 %v199, %v346
        %v348 = vpop.f32.mrb[0].mxu0
        %349 = vmatprep.mubr.bf16.mxu0 0
        %350 = vmatmul.mubr.bf16.gmra.mrb[0].mxu0 %v270
        %v351 = vpop.f32.mrb[0].mxu0
        %v352 = vadd.f32 %v199, %v351
        %v353 = vpop.f32.mrb[0].mxu0
        %v354 = vpop.f32.mrb[0].mxu0
        %v355 = vadd.f32 %v199, %v354
        %v356 = vpop.f32.mrb[0].mxu0
        %357 = vmatprep.mubr.bf16.mxu0 0
        %358 = vmatmul.mubr.bf16.gmra.mrb[0].mxu0 %v273
        %v359 = vpop.f32.mrb[0].mxu0
        %v360 = vadd.f32 %v199, %v359
        %v361 = vpop.f32.mrb[0].mxu0
        %v362 = vpop.f32.mrb[0].mxu0
        %v363 = vadd.f32 %v199, %v362
        %v364 = vpop.f32.mrb[0].mxu0
        %365 = vmatprep.mubr.bf16.mxu0 0
        %366 = vmatmul.mubr.bf16.gmra.mrb[0].mxu0 %v276
        %v367 = vpop.f32.mrb[0].mxu0
        %v368 = vadd.f32 %v199, %v367
        %v369 = vpop.f32.mrb[0].mxu0
        %v370 = vpop.f32.mrb[0].mxu0
        %v371 = vadd.f32 %v199, %v370
        %v372 = vpop.f32.mrb[0].mxu0
        %373 = vmatprep.mubr.bf16.mxu0 0
        %374 = vmatmul.mubr.bf16.gmra.mrb[0].mxu0 %v279
        %v375 = vpop.f32.mrb[0].mxu0
        %v376 = vadd.f32 %v199, %v375
        %v377 = vpop.f32.mrb[0].mxu0
        %v378 = vpop.f32.mrb[0].mxu0
        %v379 = vadd.f32 %v199, %v378
        %v380 = vpop.f32.mrb[0].mxu0
        %381 = vdwg.mxu0
        %v382 = vmax.f32 %v320, 0.0
        %v383 = vmax.f32 %v323, 0.0
        %v384 = vmax.f32 %v328, 0.0
        %v385 = vmax.f32 %v331, 0.0
        %v386 = vmax.f32 %v336, 0.0
        %v387 = vmax.f32 %v339, 0.0
        %v388 = vmax.f32 %v344, 0.0
        %v389 = vmax.f32 %v347, 0.0
        %v390 = vmax.f32 %v352, 0.0
        %v391 = vmax.f32 %v355, 0.0
        %v392 = vmax.f32 %v360, 0.0
        %v393 = vmax.f32 %v363, 0.0
        %v394 = vmax.f32 %v368, 0.0
        %v395 = vmax.f32 %v371, 0.0
        %v396 = vmax.f32 %v376, 0.0
        %v397 = vmax.f32 %v379, 0.0
        %398 = vst [vmem:[%s164] sm:$0xff] %v382
        %399 = vst [vmem:[%s164 + $0x8] sm:$0xff] %v383
        %400 = vst [vmem:[%s164 + $0x10] sm:$0xff] %v384
        %401 = vst [vmem:[%s164 + $0x18] sm:$0xff] %v385
        %402 = vst [vmem:[%s164 + $0x20] sm:$0xff] %v386
        %403 = vst [vmem:[%s164 + $0x28] sm:$0xff] %v387
        %404 = vst [vmem:[%s164 + $0x30] sm:$0xff] %v388
        %405 = vst [vmem:[%s164 + $0x38] sm:$0xff] %v389
        %406 = vst [vmem:[%s164 + $0x40] sm:$0xff] %v390
        %407 = vst [vmem:[%s164 + $0x48] sm:$0xff] %v391
        %408 = vst [vmem:[%s164 + $0x50] sm:$0xff] %v392
        %409 = vst [vmem:[%s164 + $0x58] sm:$0xff] %v393
        %410 = vst [vmem:[%s164 + $0x60] sm:$0xff] %v394
        %411 = vst [vmem:[%s164 + $0x68] sm:$0xff] %v395
        %412 = vst [vmem:[%s164 + $0x70] sm:$0xff] %v396
        %413 = vst [vmem:[%s164 + $0x78] sm:$0xff] %v397
        %s414 = sand.u32 %s93, 1
        %s415 = scalar_lea.sflag [#allocation3], %s414
        %s416 = sand.u32 %s93, 1
        %s417 = smul.addr %s416, 128
        %s418 = scalar_lea.vmem [#allocation2], %s417
        // Predicated region
        $region33: #{tpu_custom_call.1} parent=31 // pred_check
          %p419 = pneg %p103
        $region34: #{tpu_custom_call.1} parent=31 // pred_check_branch
          %421 = sbr.rel (%p419) target = $region36
        $region35: #{tpu_custom_call.1} parent=31 // pred_region
          %s422 = smul.u32 16, %s17
          %s424 = ssub.s32 2048, 2048
          %425 = vsyncadd %s415, %s424
          %s426 = smul.addr %s422, 128
          %s427 = scalar_lea.hbm %s3, %s426
          %s428 = sshll.u32 %s418, 4
          %s429 = int_to_ptr.vmem [resolvable:$true] %s428
          %434 = dma.vmem_to_hbm [thread:$0]  %s429, 2048, %s427, %s415, 128, 128, 8
        $region36: #{tpu_custom_call.1} parent=31 // pred_fallthru
          _
      $region32: #{tpu_custom_call.1} parent=5 // pred_fallthru
        _
      %p435 = scmp.le.s32.totalorder 2, %s12
      // Predicated region
      $region37: #{tpu_custom_call.1} parent=5 // pred_check
        %p436 = pneg %p435
      $region38: #{tpu_custom_call.1} parent=5 // pred_check_branch
        %438 = sbr.rel (%p436) target = $region40
      $region39: #{tpu_custom_call.1} parent=5 // pred_region
        %s439 = ssub.s32 %s12, 2
        // Predicated region
        $region41: #{tpu_custom_call.1} parent=39 // pred_check
          %p440 = pneg %p109
        $region42: #{tpu_custom_call.1} parent=39 // pred_check_branch
          %442 = sbr.rel (%p440) target = $region44
        $region43: #{tpu_custom_call.1} parent=39 // pred_region
          %s443 = sand.u32 %s94, 1
          %s444 = scalar_lea.sflag [#allocation3], %s443
          %s445 = sand.u32 %s94, 1
          %s446 = smul.addr %s445, 128
          %s447 = scalar_lea.vmem [#allocation2], %s446
          %448 = dma.done %s444, 2048
        $region44: #{tpu_custom_call.1} parent=39 // pred_fallthru
          _
      $region40: #{tpu_custom_call.1} parent=5 // pred_fallthru
        _
    $region6: #{tpu_custom_call.1} parent=1 // loop_footer
      %s16 = sadd.s32 1, %s12
    $region7: #{tpu_custom_call.1} parent=1 // loop_footer_branch
      %11 = sbr.rel target = $region3
    $region8: #{tpu_custom_call.1} parent=1 // loop_exit
      _
    %449 = vsyncpa [#allocation3], 1
    %s450 = scalar_lea.sflag [#allocation3], 1
    %451 = vsyncpa %s450, 1

</llo_original>
